<compile_context>
chip_gen: v5e
topology: v5e:2x2
jax: 0.10.0
libtpu: 0.0.40
codegen_flags: <defaults>
</compile_context>

<pallas_src>
import jax
import jax.numpy as jnp
from jax.experimental import pallas as pl
from jax.experimental.pallas import tpu as pltpu

ALPHA = 0.1      # LeakyReLU(alpha=0.1), matching the PyTorch module config.
_LANES = 128     # lane width (fast vreg axis)
_MIB = 1024 * 1024


def _leaky_relu_kernel(x_ref, o_ref):
    x = x_ref[...]
    # torch.where(x > 0, x, alpha * x)
    o_ref[...] = jnp.where(x > 0, x, jnp.asarray(ALPHA, x.dtype) * x)


def _sublane_granularity(dtype):
    """Packed-row granularity: 8 rows/vreg for 4-byte, 16 for 2-byte, 32 for 1-byte."""
    return {4: 8, 2: 16, 1: 32}.get(jnp.dtype(dtype).itemsize, 8)


def _pick_block_bytes():
    """Generation-aware streaming block size (bytes per block)."""
    try:
        kind = jax.devices()[0].device_kind.lower()
    except Exception:
        kind = ""
    # Older / lower-bandwidth chips: per-step overhead is already small at 4 MiB.
    if any(tag in kind for tag in ("v2", "v3", "v4", "v5")):
        return 4 * _MIB
    # v6e / v7x (and unknown future chips): bigger blocks amortize step cost.
    return 8 * _MIB


def _run_2d(x2d, block_rows, *, vmem_limit_bytes, donate=False):
    rows, lanes = x2d.shape
    itemsize = jnp.dtype(x2d.dtype).itemsize
    n = rows * lanes
    extra = {"input_output_aliases": {0: 0}} if donate else {}
    return pl.pallas_call(
        _leaky_relu_kernel,
        out_shape=jax.ShapeDtypeStruct((rows, lanes), x2d.dtype),
        grid=(pl.cdiv(rows, block_rows),),
        in_specs=[pl.BlockSpec((block_rows, lanes), lambda i: (i, 0))],
        out_specs=pl.BlockSpec((block_rows, lanes), lambda i: (i, 0)),
        compiler_params=pltpu.CompilerParams(
            dimension_semantics=("parallel",),
            vmem_limit_bytes=vmem_limit_bytes,
        ),
        cost_estimate=pl.CostEstimate(
            flops=n, transcendentals=0, bytes_accessed=2 * n * itemsize),
        **extra,
    )(x2d)


def leaky_relu(x, donate=False):
    """Elementwise LeakyReLU on an arbitrarily-shaped array via a Pallas kernel."""
    orig_shape = x.shape
    n = x.size
    if n == 0:
        return x
    dtype = x.dtype
    itemsize = jnp.dtype(dtype).itemsize
    sublanes = _sublane_granularity(dtype)

    block_bytes = _pick_block_bytes()
    block_rows = max(
        sublanes,
        (block_bytes // (_LANES * itemsize)) // sublanes * sublanes,
    )
    # Double-buffered in+out footprint is 4 x block; leave headroom, cap at
    # 48 MiB so we stay under v7x's 64 MiB physical VMEM.
    vmem_limit = min(48 * _MIB, 4 * block_bytes + 16 * _MIB)

    if n % _LANES == 0:
        # Pad-free fast path: reshape to a lane-dense [rows, 128] slab
        # (metadata only).  A ragged last grid block (or rows < block_rows,
        # where the block equals the full array dims) is handled by Pallas
        # write-masking, so HBM traffic is exactly 1 read + 1 write.
        rows = n // _LANES
        block_rows_eff = min(block_rows, rows)
        out2d = _run_2d(x.reshape(rows, _LANES), block_rows_eff,
                        vmem_limit_bytes=vmem_limit, donate=donate)
        return out2d.reshape(orig_shape)

    # Ragged path: run the kernel on the 128-aligned prefix; the <=127-element
    # tail is a plain fused jnp.where.  No whole-array pad/slice round trip.
    x_flat = jnp.ravel(x)
    n_main = (n // _LANES) * _LANES
    if n_main == 0:
        # Tiny array: a kernel launch buys nothing.
        return jnp.where(x > 0, x, jnp.asarray(ALPHA, dtype) * x)
    rows = n_main // _LANES
    block_rows_eff = min(block_rows, rows)
    out_main = _run_2d(x_flat[:n_main].reshape(rows, _LANES), block_rows_eff,
                       vmem_limit_bytes=vmem_limit, donate=False)
    x_tail = x_flat[n_main:]
    out_tail = jnp.where(x_tail > 0, x_tail, jnp.asarray(ALPHA, dtype) * x_tail)
    return jnp.concatenate([out_main.reshape(-1), out_tail]).reshape(orig_shape)


if __name__ == "__main__":
    key = jax.random.PRNGKey(0)
    x = jax.random.normal(key, (2, 4, 16, 16), dtype=jnp.float32)  # NCHW

    y = leaky_relu(x)
    jax.block_until_ready(y)

    # Reference check (plain JAX mirror of the PyTorch forward).
    y_ref = jnp.where(x > 0, x, ALPHA * x)
    assert y.shape == x.shape and y.dtype == x.dtype
    assert jnp.allclose(y, y_ref, atol=0, rtol=0)

    # n % 128 == 0 but rows not a multiple of 8 -> exercises the relaxed fast path.
    x_thin = jax.random.normal(jax.random.PRNGKey(2), (8, 48), dtype=jnp.float32)
    y_thin = leaky_relu(x_thin)
    jax.block_until_ready(y_thin)
    assert jnp.allclose(y_thin, jnp.where(x_thin > 0, x_thin, ALPHA * x_thin),
                        atol=0, rtol=0)

    # Ragged size with a 128-aligned prefix + tail (prefix kernel + fused tail).
    x_rag = jax.random.normal(jax.random.PRNGKey(3), (5, 100), dtype=jnp.float32)
    y_rag = leaky_relu(x_rag)
    jax.block_until_ready(y_rag)
    assert jnp.allclose(y_rag, jnp.where(x_rag > 0, x_rag, ALPHA * x_rag),
                        atol=0, rtol=0)

    # Tiny ragged size (< 128 elements) -> pure fused fallback.
    x_odd = jax.random.normal(jax.random.PRNGKey(1), (3, 5, 7), dtype=jnp.float32)
    y_odd = leaky_relu(x_odd)
    jax.block_until_ready(y_odd)
    assert jnp.allclose(y_odd, jnp.where(x_odd > 0, x_odd, ALPHA * x_odd),
                        atol=0, rtol=0)

    # bf16 path (16-row sublane granularity); alpha cast matches kernel semantics.
    x_bf = jax.random.normal(jax.random.PRNGKey(4), (4, 8, 32), dtype=jnp.bfloat16)
    y_bf = leaky_relu(x_bf)
    jax.block_until_ready(y_bf)
    a_bf = jnp.asarray(ALPHA, jnp.bfloat16)
    assert jnp.allclose(y_bf, jnp.where(x_bf > 0, x_bf, a_bf * x_bf), atol=0, rtol=0)

    print("KERNEL_OK")
</pallas_src>

<mosaic_0001>
module attributes {stable_mosaic.version = 11 : i64} {
  func.func @_leaky_relu_kernel(%arg0: i32, %arg1: memref<16x128xf32, #tpu.memory_space<vmem>>, %arg2: memref<16x128xf32, #tpu.memory_space<vmem>>) attributes {dimension_semantics = [#tpu.dimension_semantics<parallel>], iteration_bounds = array<i64: 1>, scalar_prefetch = 0 : i64, scratch_operands = 0 : i64, tpu.core_type = #tpu.core_type<tc>, window_params = [{transform_indices = @transform_0, window_bounds = array<i64: 16, 128>}, {transform_indices = @transform_1, window_bounds = array<i64: 16, 128>}]} {
    %c0 = arith.constant 0 : index
    %c0_0 = arith.constant 0 : index
    %0 = vector.load %arg1[%c0, %c0_0] : memref<16x128xf32, #tpu.memory_space<vmem>>, vector<16x128xf32>
    %cst = arith.constant 0.000000e+00 : f32
    %1 = vector.broadcast %cst : f32 to vector<16x128xf32>
    %2 = arith.cmpf ogt, %0, %1 : vector<16x128xf32>
    %cst_1 = arith.constant 1.000000e-01 : f32
    %3 = vector.broadcast %cst_1 : f32 to vector<16x128xf32>
    %4 = arith.mulf %3, %0 : vector<16x128xf32>
    %5 = arith.select %2, %0, %4 : vector<16x128xi1>, vector<16x128xf32>
    %c0_2 = arith.constant 0 : index
    %c0_3 = arith.constant 0 : index
    %6 = vector.load %arg2[%c0_2, %c0_3] : memref<16x128xf32, #tpu.memory_space<vmem>>, vector<16x128xf32>
    tpu.vector_store %arg2[%c0_2, %c0_3], %5 {strides = array<i32>} : memref<16x128xf32, #tpu.memory_space<vmem>>, vector<16x128xf32>,
    return
  }
  func.func @transform_0(%arg0: i32) -> (i32, i32) {
    %c0_i32 = arith.constant 0 : i32
    %c0_i32_0 = arith.constant 0 : i32
    return %arg0, %c0_i32 : i32, i32
  }
  func.func @transform_1(%arg0: i32) -> (i32, i32) {
    %c0_i32 = arith.constant 0 : i32
    %c0_i32_0 = arith.constant 0 : i32
    return %arg0, %c0_i32 : i32, i32
  }
}

</mosaic_0001>

<llo_original>
// kernel: tpu_custom_call.1
$region0: #{tpu_custom_call.1}
  #allocation0 [shape = 'u32[]', space=smem, size = 0x4, offset = 0x4, fixed_abs, tag = 'smem constant byte address 0x4 - core index']
  #allocation1 [shape = 'u32[72,128]{1,0:T(1,128)}', space=vmem, size = 0x9000, scoped, tag = 'internal scratch']
  %s0 = inlined_call_operand.hbm [shape: f32[16,128], index: 0, kind: input, shape index: {}]
  %s1 = inlined_call_operand.hbm [shape: f32[16,128], index: 1, kind: output, shape index: {}]
  %s2 = sld [smem:[#allocation0]]
  $region18: #{tpu_custom_call.1} parent=0
    _
  %s4 = ssub.s32 1, %s2
  %s5 = scalar_select 0, %s4, %s2
  $region1: #{tpu_custom_call.1} parent=0
    #allocation2 [shape = 'u8[8192]{0}', space=vmem, size = 0x2000, scoped, tag = 'input window, operand 0, single buffered']
    #allocation3 [shape = 's32[1]{0}', space=sflag, size = 0x4, scoped, tag = 'scoped memory for tpu_custom_call.1']
    #allocation4 [shape = 's32[1]{0}', space=sflag, size = 0x4, scoped, tag = 'scoped memory for tpu_custom_call.1']
    #allocation5 [shape = 'u8[8192]{0}', space=vmem, size = 0x2000, scoped, tag = 'output window, operand 0, single buffered']
    %6 = vsyncpa [#allocation3], 0
    %7 = vsyncpa [#allocation4], 0
    // Predicated region
    $region2: #{tpu_custom_call.1} parent=1 // pred_check
      _
    $region3: #{tpu_custom_call.1} parent=1 // pred_check_branch
      %9 = sbr.rel (0) target = $region5
    $region4: #{tpu_custom_call.1} parent=1 // pred_region
      %11 = vsyncadd [#allocation3], 0
      %s12 = sshll.u32 %s0, 4
      %s13 = int_to_ptr.hbm [resolvable:$true] %s12
      %s14 = sshll.u32 [#allocation2], 4
      %s15 = int_to_ptr.vmem [resolvable:$true] %s14
      %20 = dma.hbm_to_vmem [thread:$0]  %s13, 256, %s15, [#allocation3], 128, 128, 8
    $region5: #{tpu_custom_call.1} parent=1 // pred_fallthru
      _
    // Predicated region
    $region6: #{tpu_custom_call.1} parent=1 // pred_check
      _
    $region7: #{tpu_custom_call.1} parent=1 // pred_check_branch
      %22 = sbr.rel (0) target = $region9
    $region8: #{tpu_custom_call.1} parent=1 // pred_region
      %24 = dma.done [#allocation3], 256
    $region9: #{tpu_custom_call.1} parent=1 // pred_fallthru
      _
    %v25 = vld [vmem:[#allocation2] sm:$0xff]
    %v26 = vld [vmem:[#allocation2 + $0x8] sm:$0xff]
    %vm27 = vcmp.gt.f32.partialorder %v25, 0.0
    %vm28 = vcmp.gt.f32.partialorder %v26, 0.0
    %v29 = vmul.f32 %v25, 0.1
    %v30 = vmul.f32 %v26, 0.1
    %v31 = vsel %vm27, %v25, %v29
    %v32 = vsel %vm28, %v26, %v30
    %33 = vst [vmem:[#allocation5] sm:$0xff] %v31
    %34 = vst [vmem:[#allocation5 + $0x8] sm:$0xff] %v32
    // Predicated region
    $region10: #{tpu_custom_call.1} parent=1 // pred_check
      _
    $region11: #{tpu_custom_call.1} parent=1 // pred_check_branch
      %36 = sbr.rel (0) target = $region13
    $region12: #{tpu_custom_call.1} parent=1 // pred_region
      %38 = vsyncadd [#allocation4], 0
      %s39 = sshll.u32 [#allocation5], 4
      %s40 = int_to_ptr.vmem [resolvable:$true] %s39
      %s41 = sshll.u32 %s1, 4
      %s42 = int_to_ptr.hbm [resolvable:$true] %s41
      %47 = dma.vmem_to_hbm [thread:$0]  %s40, 256, %s42, [#allocation4], 128, 128, 8
    $region13: #{tpu_custom_call.1} parent=1 // pred_fallthru
      _
    // Predicated region
    $region14: #{tpu_custom_call.1} parent=1 // pred_check
      _
    $region15: #{tpu_custom_call.1} parent=1 // pred_check_branch
      %49 = sbr.rel (0) target = $region17
    $region16: #{tpu_custom_call.1} parent=1 // pred_region
      %51 = dma.done [#allocation4], 256
    $region17: #{tpu_custom_call.1} parent=1 // pred_fallthru
      _
    %52 = vsyncpa [#allocation3], 1
    %53 = vsyncpa [#allocation4], 1

</llo_original>
